<compile_context>
chip_gen: v5e
topology: v5e:2x2
jax: 0.10.0
libtpu: 0.0.40
codegen_flags: <defaults>
</compile_context>

<pallas_src>
import jax
import jax.numpy as jnp
import numpy as np
from jax.experimental import pallas as pl
from jax.experimental.pallas import tpu as pltpu


# --------------------------------------------------------------------------
# Fused kernel: RBF coefficients (recomputed per step, tiny) + POD expansion
# --------------------------------------------------------------------------
def fused_podrbf_kernel(x_ref, ct_ref, wk_ref, wl_ref, wc_ref,
                        shift_ref, inv_scale_ref, eps_ref,
                        basis_ref, out_ref):
    n, d = x_ref.shape            # queries (raw), d is small & static
    m = ct_ref.shape[1]           # centers, transposed to (d, M), lane-dense

    x = x_ref[...]                # (N, d)
    eps = eps_ref[0]              # scalar from SMEM
    xe = x * eps                  # epsilon-scaled queries
    cv = ct_ref[...]              # (d, M) epsilon-scaled centers

    # Pairwise squared distances via direct differences (VPU broadcast),
    # avoiding the fp32 cancellation of the ||x||^2+||y||^2-2xy expansion.
    r2 = jnp.zeros((n, m), jnp.float32)
    for k in range(d):                                   # static unroll
        diff = xe[:, k:k + 1] - cv[k:k + 1, :]           # (N,1)-(1,M)->(N,M)
        r2 = r2 + diff * diff

    # Thin-plate-spline kernel: r^2 log(r) = 0.5 * r2 * log(r2), limit 0 at 0
    # (sqrt-free; single guard keeps log finite so no NaN is ever formed).
    K = 0.5 * r2 * jnp.log(jnp.where(r2 > 0.0, r2, 1.0))   # (N, M)

    # coefficients = K @ w_kernel + P_lin @ w_lin + w_const
    coef = jnp.dot(K, wk_ref[...], preferred_element_type=jnp.float32)
    coef = coef + wc_ref[...]                            # (1, rank) broadcast
    xp = (x - shift_ref[...]) * inv_scale_ref[...]       # degree-1 poly inputs
    wl = wl_ref[...]                                     # (d, rank)
    for k in range(d):                                   # broadcast FMAs
        coef = coef + xp[:, k:k + 1] * wl[k:k + 1, :]

    # POD expansion of this dof tile: bf16 MXU operands (halves the dominant
    # HBM stream), f32 accumulate, f32 store.
    out_ref[...] = jnp.dot(coef.astype(basis_ref.dtype), basis_ref[...],
                           preferred_element_type=jnp.float32
                           ).astype(out_ref.dtype)


# --------------------------------------------------------------------------
# Tile sizing / VMEM budgeting (generation-aware)
# --------------------------------------------------------------------------
def _vmem_capacity_bytes():
    try:
        return int(pltpu.get_tpu_info().vmem_capacity_bytes)
    except Exception:
        return 64 << 20          # conservative (v7x per-TensorCore physical)


def _choose_dof_tile(dof, rank, n, basis_itemsize, out_itemsize, vmem_cap):
    """Largest lane-dense dof tile that fits the double-buffered VMEM budget,
    preferring tiles that divide dof (unmasked final store) and >=2 tiles."""
    budget = min(vmem_cap // 2, 48 << 20)
    per_col = 2 * (rank * basis_itemsize + n * out_itemsize)  # dbl-buffered
    max_td = (budget // per_col // 128) * 128
    max_td = int(min(max(max_td, 128), 64 * 1024))
    if dof <= max_td:
        # Whole field fits in one tile: split in two lane-dense tiles when
        # possible so both v7x TensorCores get work.
        if dof % 256 == 0:
            return dof // 2
        return dof
    td = max_td
    while td >= 128:                      # largest multiple of 128 dividing dof
        if dof % td == 0:
            return td
        td -= 128
    return max_td                         # fallback: masked tail on last tile


# --------------------------------------------------------------------------
# Setup (fit-time constants) and forward
# --------------------------------------------------------------------------
def prepare_podrbf(centers, w_kernel, w_lin, w_const, basis, eps, shift, scale,
                   *, basis_dtype=jnp.bfloat16):
    """One-time model-constant preparation (done at fit time, not per call)."""
    centers = jnp.asarray(centers, jnp.float32)
    eps = jnp.asarray(eps, jnp.float32).reshape(())
    return dict(
        ct_eps=(centers * eps).T,                             # (d, M) lane-dense
        w_kernel=jnp.asarray(w_kernel, jnp.float32),          # (M, rank)
        w_lin=jnp.asarray(w_lin, jnp.float32),                # (d, rank)
        w_const=jnp.asarray(w_const, jnp.float32).reshape(1, -1),
        shift=jnp.asarray(shift, jnp.float32).reshape(1, -1),
        inv_scale=1.0 / jnp.asarray(scale, jnp.float32).reshape(1, -1),
        eps=eps.reshape(1),                                   # scalar -> SMEM
        basis=jnp.asarray(basis, basis_dtype),                # (rank, dof) in HBM
    )


def podrbf_forward(x, params):
    """Single fused pallas_call; only hot-path work, no per-call XLA glue."""
    x = jnp.asarray(x, jnp.float32)
    N, d = x.shape
    ct_eps = params["ct_eps"]
    M = ct_eps.shape[1]
    basis = params["basis"]
    rank, dof = basis.shape

    vmem_cap = _vmem_capacity_bytes()
    td = _choose_dof_tile(dof, rank, N, basis.dtype.itemsize, 4, vmem_cap)
    n_tiles = pl.cdiv(dof, td)

    # Double-buffered streamed tiles + resident operands + (N,M)/(N,rank)
    # intermediates, plus headroom; clamped to physical capacity.
    resident = 4 * (N * d + d * M + M * rank + d * rank + rank + 2 * d
                    + 2 * N * M + N * rank)
    needed = 2 * td * (rank * basis.dtype.itemsize + N * 4) + resident
    vmem_limit = int(min(vmem_cap, needed + (8 << 20)))

    # TODO(synk): for very large N*M, additionally tile the coefficient part
    # over N (block N in multiples of 8, 'parallel') to bound VMEM/vreg use.
    return pl.pallas_call(
        fused_podrbf_kernel,
        out_shape=jax.ShapeDtypeStruct((N, dof), jnp.float32),
        grid=(n_tiles,),
        in_specs=[
            pl.BlockSpec((N, d), lambda j: (0, 0)),           # x: resident
            pl.BlockSpec((d, M), lambda j: (0, 0)),           # centers*eps ^T
            pl.BlockSpec((M, rank), lambda j: (0, 0)),        # w_kernel
            pl.BlockSpec((d, rank), lambda j: (0, 0)),        # w_lin
            pl.BlockSpec((1, rank), lambda j: (0, 0)),        # w_const
            pl.BlockSpec((1, d), lambda j: (0, 0)),           # shift
            pl.BlockSpec((1, d), lambda j: (0, 0)),           # 1/scale
            pl.BlockSpec(memory_space=pltpu.MemorySpace.SMEM),  # eps scalar
            pl.BlockSpec((rank, td), lambda j: (0, j)),       # basis: streamed
        ],
        out_specs=pl.BlockSpec((N, td), lambda j: (0, j)),
        compiler_params=pltpu.CompilerParams(
            dimension_semantics=("parallel",),
            vmem_limit_bytes=vmem_limit),
    )(x, ct_eps, params["w_kernel"], params["w_lin"], params["w_const"],
      params["shift"], params["inv_scale"], params["eps"], basis)


# --------------------------------------------------------------------------
# Pure-JAX f32 reference (scipy / PINA RBFBlock + PODBlock.expand semantics)
# --------------------------------------------------------------------------
def ref_forward(x, centers, w_kernel, w_lin, w_const, basis, eps, shift, scale):
    diff = x[:, None, :] * eps - centers[None, :, :] * eps
    r = jnp.sqrt(jnp.sum(diff * diff, axis=-1))
    r_safe = jnp.where(r > 0.0, r, 1.0)
    K = jnp.where(r > 0.0, r * r * jnp.log(r_safe), 0.0)
    P_lin = (x - shift) / scale
    coef = K @ w_kernel + P_lin @ w_lin + w_const
    return coef @ basis


if __name__ == "__main__":
    # Small, module-consistent shapes: N query points with a single 'mu'
    # parameter, M training snapshots/centers, POD rank, and n_dofs field size.
    N, d, M, rank, dof = 8, 1, 16, 8, 256

    key = jax.random.PRNGKey(0)
    k1, k2, k3, k4, k5, k6 = jax.random.split(key, 6)

    x = jax.random.uniform(k1, (N, d), dtype=jnp.float32)          # query 'mu'
    centers = jax.random.uniform(k2, (M, d), dtype=jnp.float32)    # fitted params
    w_kernel = 0.1 * jax.random.normal(k3, (M, rank), dtype=jnp.float32)
    w_lin = 0.1 * jax.random.normal(k4, (d, rank), dtype=jnp.float32)
    w_const = 0.1 * jax.random.normal(k5, (1, rank), dtype=jnp.float32)
    basis = 0.1 * jax.random.normal(k6, (rank, dof), dtype=jnp.float32)

    # Thin-plate-spline defaults (scipy / PINA RBFBlock): epsilon = 1, degree-1
    # polynomial tail with shift/scale derived from the fitted centers.
    eps = jnp.float32(1.0)
    cmin = jnp.min(centers, axis=0)
    cmax = jnp.max(centers, axis=0)
    shift = (cmin + cmax) / 2.0
    scale = jnp.maximum((cmax - cmin) / 2.0, 1e-6)

    params = prepare_podrbf(centers, w_kernel, w_lin, w_const, basis,
                            eps, shift, scale)            # fit-time constants
    out = podrbf_forward(x, params)
    out = jax.block_until_ready(out)

    ref = ref_forward(x, centers, w_kernel, w_lin, w_const, basis,
                      eps, shift, scale)
    # bf16 POD basis / bf16 MXU operands -> slightly loosened tolerance.
    np.testing.assert_allclose(np.asarray(out), np.asarray(ref),
                               rtol=1e-2, atol=2e-3)

    # TODO(synk): PODBlock.fit / RBFBlock.fit (SVD + linear solve) are
    # training-time routines, not part of forward(); weights are synthesized.
    print("KERNEL_OK")
</pallas_src>

<mosaic_0001>
module attributes {stable_mosaic.version = 11 : i64} {
  func.func @fused_podrbf_kernel(%arg0: i32, %arg1: memref<8x1xf32, #tpu.memory_space<vmem>>, %arg2: memref<1x16xf32, #tpu.memory_space<vmem>>, %arg3: memref<16x8xf32, #tpu.memory_space<vmem>>, %arg4: memref<1x8xf32, #tpu.memory_space<vmem>>, %arg5: memref<1x8xf32, #tpu.memory_space<vmem>>, %arg6: memref<1x1xf32, #tpu.memory_space<vmem>>, %arg7: memref<1x1xf32, #tpu.memory_space<vmem>>, %arg8: memref<1xf32, #tpu.memory_space<smem>>, %arg9: memref<8x128xbf16, #tpu.memory_space<vmem>>, %arg10: memref<8x128xf32, #tpu.memory_space<vmem>>) attributes {dimension_semantics = [#tpu.dimension_semantics<parallel>], iteration_bounds = array<i64: 2>, scalar_prefetch = 0 : i64, scratch_operands = 0 : i64, tpu.core_type = #tpu.core_type<tc>, window_params = [{pipeline_mode = #tpu.pipeline_mode<synchronous>, transform_indices = @transform_0, window_bounds = array<i64: 8, 1>}, {pipeline_mode = #tpu.pipeline_mode<synchronous>, transform_indices = @transform_1, window_bounds = array<i64: 1, 16>}, {pipeline_mode = #tpu.pipeline_mode<synchronous>, transform_indices = @transform_2, window_bounds = array<i64: 16, 8>}, {pipeline_mode = #tpu.pipeline_mode<synchronous>, transform_indices = @transform_3, window_bounds = array<i64: 1, 8>}, {pipeline_mode = #tpu.pipeline_mode<synchronous>, transform_indices = @transform_4, window_bounds = array<i64: 1, 8>}, {pipeline_mode = #tpu.pipeline_mode<synchronous>, transform_indices = @transform_5, window_bounds = array<i64: 1, 1>}, {pipeline_mode = #tpu.pipeline_mode<synchronous>, transform_indices = @transform_6, window_bounds = array<i64: 1, 1>}, {transform_indices = @transform_7, window_bounds = array<i64: 1>}, {transform_indices = @transform_8, window_bounds = array<i64: 8, 128>}, {transform_indices = @transform_9, window_bounds = array<i64: 8, 128>}]} {
    %c0 = arith.constant 0 : index
    %c0_0 = arith.constant 0 : index
    %0 = vector.load %arg1[%c0, %c0_0] : memref<8x1xf32, #tpu.memory_space<vmem>>, vector<8x1xf32>
    %c0_1 = arith.constant 0 : index
    %1 = memref.load %arg8[%c0_1] : memref<1xf32, #tpu.memory_space<smem>>
    %2 = vector.broadcast %1 : f32 to vector<8x1xf32>
    %3 = arith.mulf %0, %2 : vector<8x1xf32>
    %c0_2 = arith.constant 0 : index
    %c0_3 = arith.constant 0 : index
    %4 = vector.load %arg2[%c0_2, %c0_3] : memref<1x16xf32, #tpu.memory_space<vmem>>, vector<1x16xf32>
    %cst = arith.constant 0.000000e+00 : f32
    %5 = vector.broadcast %cst : f32 to vector<8x16xf32>
    %6 = vector.broadcast %3 : vector<8x1xf32> to vector<8x16xf32>
    %7 = vector.broadcast %4 : vector<1x16xf32> to vector<8x16xf32>
    %8 = arith.subf %6, %7 : vector<8x16xf32>
    %9 = arith.mulf %8, %8 : vector<8x16xf32>
    %10 = arith.addf %5, %9 : vector<8x16xf32>
    %cst_4 = arith.constant 5.000000e-01 : f32
    %11 = vector.broadcast %cst_4 : f32 to vector<8x16xf32>
    %12 = arith.mulf %11, %10 : vector<8x16xf32>
    %cst_5 = arith.constant 0.000000e+00 : f32
    %13 = vector.broadcast %cst_5 : f32 to vector<8x16xf32>
    %14 = arith.cmpf ogt, %10, %13 : vector<8x16xf32>
    %cst_6 = arith.constant 1.000000e+00 : f32
    %15 = vector.broadcast %cst_6 : f32 to vector<8x16xf32>
    %16 = arith.select %14, %10, %15 : vector<8x16xi1>, vector<8x16xf32>
    %17 = math.log %16 : vector<8x16xf32>
    %18 = arith.mulf %12, %17 : vector<8x16xf32>
    %c0_7 = arith.constant 0 : index
    %c0_8 = arith.constant 0 : index
    %19 = vector.load %arg3[%c0_7, %c0_8] : memref<16x8xf32, #tpu.memory_space<vmem>>, vector<16x8xf32>
    %cst_9 = arith.constant dense<0.000000e+00> : vector<8x8xf32>
    %20 = tpu.matmul %18, %19, %cst_9 {dimension_numbers = #tpu.dot_dimension_numbers<[1], [0], [0], [1], [0, 0, 1, 1], [], []>} : vector<8x16xf32>, vector<16x8xf32>, vector<8x8xf32> -> vector<8x8xf32>
    %c0_10 = arith.constant 0 : index
    %c0_11 = arith.constant 0 : index
    %21 = vector.load %arg5[%c0_10, %c0_11] : memref<1x8xf32, #tpu.memory_space<vmem>>, vector<1x8xf32>
    %22 = vector.broadcast %21 : vector<1x8xf32> to vector<8x8xf32>
    %23 = arith.addf %20, %22 : vector<8x8xf32>
    %c0_12 = arith.constant 0 : index
    %c0_13 = arith.constant 0 : index
    %24 = vector.load %arg6[%c0_12, %c0_13] : memref<1x1xf32, #tpu.memory_space<vmem>>, vector<1x1xf32>
    %25 = vector.broadcast %24 : vector<1x1xf32> to vector<8x1xf32>
    %26 = arith.subf %0, %25 : vector<8x1xf32>
    %c0_14 = arith.constant 0 : index
    %c0_15 = arith.constant 0 : index
    %27 = vector.load %arg7[%c0_14, %c0_15] : memref<1x1xf32, #tpu.memory_space<vmem>>, vector<1x1xf32>
    %28 = vector.broadcast %27 : vector<1x1xf32> to vector<8x1xf32>
    %29 = arith.mulf %26, %28 : vector<8x1xf32>
    %c0_16 = arith.constant 0 : index
    %c0_17 = arith.constant 0 : index
    %30 = vector.load %arg4[%c0_16, %c0_17] : memref<1x8xf32, #tpu.memory_space<vmem>>, vector<1x8xf32>
    %31 = vector.broadcast %29 : vector<8x1xf32> to vector<8x8xf32>
    %32 = vector.broadcast %30 : vector<1x8xf32> to vector<8x8xf32>
    %33 = arith.mulf %31, %32 : vector<8x8xf32>
    %34 = arith.addf %23, %33 : vector<8x8xf32>
    %35 = arith.truncf %34 : vector<8x8xf32> to vector<8x8xbf16>
    %c0_18 = arith.constant 0 : index
    %c0_19 = arith.constant 0 : index
    %36 = vector.load %arg9[%c0_18, %c0_19] : memref<8x128xbf16, #tpu.memory_space<vmem>>, vector<8x128xbf16>
    %cst_20 = arith.constant dense<0.000000e+00> : vector<8x128xf32>
    %37 = tpu.matmul %35, %36, %cst_20 {dimension_numbers = #tpu.dot_dimension_numbers<[1], [0], [0], [1], [0, 0, 1, 1], [], []>} : vector<8x8xbf16>, vector<8x128xbf16>, vector<8x128xf32> -> vector<8x128xf32>
    %c0_21 = arith.constant 0 : index
    %c0_22 = arith.constant 0 : index
    %38 = vector.load %arg10[%c0_21, %c0_22] : memref<8x128xf32, #tpu.memory_space<vmem>>, vector<8x128xf32>
    tpu.vector_store %arg10[%c0_21, %c0_22], %37 {strides = array<i32>} : memref<8x128xf32, #tpu.memory_space<vmem>>, vector<8x128xf32>,
    return
  }
  func.func @transform_0(%arg0: i32) -> (i32, i32) {
    %c0_i32 = arith.constant 0 : i32
    %c0_i32_0 = arith.constant 0 : i32
    %c0_i32_1 = arith.constant 0 : i32
    return %c0_i32, %c0_i32_0 : i32, i32
  }
  func.func @transform_1(%arg0: i32) -> (i32, i32) {
    %c0_i32 = arith.constant 0 : i32
    %c0_i32_0 = arith.constant 0 : i32
    %c0_i32_1 = arith.constant 0 : i32
    return %c0_i32, %c0_i32_0 : i32, i32
  }
  func.func @transform_2(%arg0: i32) -> (i32, i32) {
    %c0_i32 = arith.constant 0 : i32
    %c0_i32_0 = arith.constant 0 : i32
    %c0_i32_1 = arith.constant 0 : i32
    return %c0_i32, %c0_i32_0 : i32, i32
  }
  func.func @transform_3(%arg0: i32) -> (i32, i32) {
    %c0_i32 = arith.constant 0 : i32
    %c0_i32_0 = arith.constant 0 : i32
    %c0_i32_1 = arith.constant 0 : i32
    return %c0_i32, %c0_i32_0 : i32, i32
  }
  func.func @transform_4(%arg0: i32) -> (i32, i32) {
    %c0_i32 = arith.constant 0 : i32
    %c0_i32_0 = arith.constant 0 : i32
    %c0_i32_1 = arith.constant 0 : i32
    return %c0_i32, %c0_i32_0 : i32, i32
  }
  func.func @transform_5(%arg0: i32) -> (i32, i32) {
    %c0_i32 = arith.constant 0 : i32
    %c0_i32_0 = arith.constant 0 : i32
    %c0_i32_1 = arith.constant 0 : i32
    return %c0_i32, %c0_i32_0 : i32, i32
  }
  func.func @transform_6(%arg0: i32) -> (i32, i32) {
    %c0_i32 = arith.constant 0 : i32
    %c0_i32_0 = arith.constant 0 : i32
    %c0_i32_1 = arith.constant 0 : i32
    return %c0_i32, %c0_i32_0 : i32, i32
  }
  func.func @transform_7(%arg0: i32) -> i32 {
    %c0_i32 = arith.constant 0 : i32
    %c0_i32_0 = arith.constant 0 : i32
    return %c0_i32 : i32
  }
  func.func @transform_8(%arg0: i32) -> (i32, i32) {
    %c0_i32 = arith.constant 0 : i32
    %c0_i32_0 = arith.constant 0 : i32
    return %c0_i32, %arg0 : i32, i32
  }
  func.func @transform_9(%arg0: i32) -> (i32, i32) {
    %c0_i32 = arith.constant 0 : i32
    %c0_i32_0 = arith.constant 0 : i32
    return %c0_i32, %arg0 : i32, i32
  }
}

</mosaic_0001>

<llo_original>
// kernel: tpu_custom_call.1
$region0: #{tpu_custom_call.1}
  #allocation0 [shape = 'u32[]', space=smem, size = 0x4, offset = 0x4, fixed_abs, tag = 'smem constant byte address 0x4 - core index']
  #allocation1 [shape = 'u32[72,128]{1,0:T(1,128)}', space=vmem, size = 0x9000, scoped, tag = 'internal scratch']
  #allocation2 [shape = 'f32[1,1]{1,0:T(1,128)S(1)}', space=vmem, size = 0x200, scoped, tag = 'scoped memory for tpu_custom_call.1']
  #allocation3 [shape = 'f32[1,1]{1,0:T(1,128)S(1)}', space=vmem, size = 0x200, scoped, tag = 'scoped memory for tpu_custom_call.1']
  #allocation4 [shape = 'f32[1]{0:T(128)S(6)}', space=smem, size = 0x200, scoped, tag = 'scoped memory for tpu_custom_call.1']
  %s0 = inlined_call_operand.vmem [shape: f32[8,1], index: 0, kind: input, shape index: {}]
  %s1 = inlined_call_operand.vmem [shape: f32[1,16], index: 1, kind: input, shape index: {}]
  %s2 = inlined_call_operand.vmem [shape: f32[16,8], index: 2, kind: input, shape index: {}]
  %s3 = inlined_call_operand.vmem [shape: f32[1,8], index: 3, kind: input, shape index: {}]
  %s4 = inlined_call_operand.vmem [shape: f32[1,8], index: 4, kind: input, shape index: {}]
  %s5 = inlined_call_operand.<no memory space> [shape: f32[1,1], index: 5, kind: input, shape index: {}]
  %s6 = inlined_call_operand.<no memory space> [shape: f32[1,1], index: 6, kind: input, shape index: {}]
  %s7 = inlined_call_operand.<no memory space> [shape: f32[1], index: 7, kind: input, shape index: {}]
  %s8 = inlined_call_operand.vmem [shape: bf16[8,256], index: 8, kind: input, shape index: {}]
  %s9 = inlined_call_operand.hbm [shape: f32[8,256], index: 9, kind: output, shape index: {}]
  %s10 = sld [smem:[#allocation0]]
  $region69: #{tpu_custom_call.1} parent=0
    _
  %s12 = ssub.s32 1, %s10
  %s13 = scalar_select 0, %s12, %s10
  %v14 = vstv %s5
  %15 = vst [vmem:[#allocation2] sm:$0x1] %v14
  %v16 = vstv %s6
  %17 = vst [vmem:[#allocation3] sm:$0x1] %v16
  %18 = sst [smem:[#allocation4]] %s7
  $region1: #{tpu_custom_call.1} parent=0
    #allocation5 [shape = 'u8[8192]{0}', space=vmem, size = 0x2000, scoped, tag = 'output window, operand 0']
    #allocation6 [shape = 's32[2]{0}', space=sflag, size = 0x8, scoped, tag = 'scoped memory for tpu_custom_call.1']
    %19 = vsyncpa [#allocation6], 0
    %s20 = scalar_lea.sflag [#allocation6], 1
    %21 = vsyncpa %s20, 0
    loop: start=0, step=1, limit=4
    $region2: #{tpu_custom_call.1} parent=1 // loop_pre_header
      _
    $region3: #{tpu_custom_call.1} parent=1 // loop_header
      %s23 = sphi 0, %s27
      %p24 = scmp.ge.s32.totalorder %s23, 4
      %s31 = sphi 0, %s31
      %s33 = sphi 0, %s31
      %s34 = sphi 0, %s33
      %s48 = sphi 0, %s34
      %s52 = sphi 0, %s52
      %s54 = sphi 0, %s52
      %s55 = sphi 0, %s54
      %s69 = sphi 0, %s55
      %s73 = sphi 0, %s73
      %s75 = sphi 0, %s73
      %s76 = sphi 0, %s75
      %s90 = sphi 0, %s76
      %s94 = sphi 0, %s94
      %s96 = sphi 0, %s94
      %s97 = sphi 0, %s96
      %s111 = sphi 0, %s97
      %s115 = sphi 0, %s115
      %s117 = sphi 0, %s115
      %s118 = sphi 0, %s117
      %s132 = sphi 0, %s118
      %s136 = sphi 0, %s136
      %s138 = sphi 0, %s136
      %s139 = sphi 0, %s138
      %s153 = sphi 0, %s139
      %s157 = sphi 0, %s157
      %s159 = sphi 0, %s157
      %s160 = sphi 0, %s159
      %s174 = sphi 0, %s160
      %s178 = sphi 0, %s178
      %s180 = sphi 0, %s178
      %s181 = sphi 0, %s180
      %s195 = sphi 0, %s181
      %s201 = sphi 0, %s203
      %s204 = sphi 0, %s201
      %s205 = sphi 0, %s204
      %s221 = sphi 0, %s205
      %s227 = sphi 0, %s229
      %s230 = sphi 0, %s227
      %s231 = sphi 0, %s230
      %s247 = sphi 0, %s231
    $region4: #{tpu_custom_call.1} parent=1 // loop_header_branch
      %26 = sbr.rel (%p24) target = $region8
    $region5: #{tpu_custom_call.1} parent=1 // loop_body
      %s28 = ssub.s32 %s23, 1
      %s29 = ssub.s32 %s23, 2
      %s30 = sadd.s32 %s23, 1
      %s32 = sadd.s32 %s31, 1
      %p35 = scmp.eq.s32.totalorder %s23, 1
      %p36 = scmp.ne.s32.totalorder %s31, %s33
      %p37 = scmp.eq.s32.totalorder %s23, 0
      %p38 = por %p36, %p37
      %p39 = scmp.ne.s32.totalorder %s31, %s33
      %p40 = scmp.eq.s32.totalorder %s28, 1
      %p41 = por %p39, %p40
      %p42 = scmp.ne.s32.totalorder %s33, %s34
      %p43 = scmp.eq.s32.totalorder %s28, 0
      %p44 = por %p42, %p43
      %p45 = scmp.ne.s32.totalorder %s33, %s34
      %p46 = scmp.eq.s32.totalorder %s29, 1
      %p47 = por %p45, %p46
      %p49 = scmp.ne.s32.totalorder %s34, %s48
      %p50 = scmp.eq.s32.totalorder %s29, 0
      %p51 = por %p49, %p50
      %s53 = sadd.s32 %s52, 1
      %p56 = scmp.eq.s32.totalorder %s23, 1
      %p57 = scmp.ne.s32.totalorder %s52, %s54
      %p58 = scmp.eq.s32.totalorder %s23, 0
      %p59 = por %p57, %p58
      %p60 = scmp.ne.s32.totalorder %s52, %s54
      %p61 = scmp.eq.s32.totalorder %s28, 1
      %p62 = por %p60, %p61
      %p63 = scmp.ne.s32.totalorder %s54, %s55
      %p64 = scmp.eq.s32.totalorder %s28, 0
      %p65 = por %p63, %p64
      %p66 = scmp.ne.s32.totalorder %s54, %s55
      %p67 = scmp.eq.s32.totalorder %s29, 1
      %p68 = por %p66, %p67
      %p70 = scmp.ne.s32.totalorder %s55, %s69
      %p71 = scmp.eq.s32.totalorder %s29, 0
      %p72 = por %p70, %p71
      %s74 = sadd.s32 %s73, 1
      %p77 = scmp.eq.s32.totalorder %s23, 1
      %p78 = scmp.ne.s32.totalorder %s73, %s75
      %p79 = scmp.eq.s32.totalorder %s23, 0
      %p80 = por %p78, %p79
      %p81 = scmp.ne.s32.totalorder %s73, %s75
      %p82 = scmp.eq.s32.totalorder %s28, 1
      %p83 = por %p81, %p82
      %p84 = scmp.ne.s32.totalorder %s75, %s76
      %p85 = scmp.eq.s32.totalorder %s28, 0
      %p86 = por %p84, %p85
      %p87 = scmp.ne.s32.totalorder %s75, %s76
      %p88 = scmp.eq.s32.totalorder %s29, 1
      %p89 = por %p87, %p88
      %p91 = scmp.ne.s32.totalorder %s76, %s90
      %p92 = scmp.eq.s32.totalorder %s29, 0
      %p93 = por %p91, %p92
      %s95 = sadd.s32 %s94, 1
      %p98 = scmp.eq.s32.totalorder %s23, 1
      %p99 = scmp.ne.s32.totalorder %s94, %s96
      %p100 = scmp.eq.s32.totalorder %s23, 0
      %p101 = por %p99, %p100
      %p102 = scmp.ne.s32.totalorder %s94, %s96
      %p103 = scmp.eq.s32.totalorder %s28, 1
      %p104 = por %p102, %p103
      %p105 = scmp.ne.s32.totalorder %s96, %s97
      %p106 = scmp.eq.s32.totalorder %s28, 0
      %p107 = por %p105, %p106
      %p108 = scmp.ne.s32.totalorder %s96, %s97
      %p109 = scmp.eq.s32.totalorder %s29, 1
      %p110 = por %p108, %p109
      %p112 = scmp.ne.s32.totalorder %s97, %s111
      %p113 = scmp.eq.s32.totalorder %s29, 0
      %p114 = por %p112, %p113
      %s116 = sadd.s32 %s115, 1
      %p119 = scmp.eq.s32.totalorder %s23, 1
      %p120 = scmp.ne.s32.totalorder %s115, %s117
      %p121 = scmp.eq.s32.totalorder %s23, 0
      %p122 = por %p120, %p121
      %p123 = scmp.ne.s32.totalorder %s115, %s117
      %p124 = scmp.eq.s32.totalorder %s28, 1
      %p125 = por %p123, %p124
      %p126 = scmp.ne.s32.totalorder %s117, %s118
      %p127 = scmp.eq.s32.totalorder %s28, 0
      %p128 = por %p126, %p127
      %p129 = scmp.ne.s32.totalorder %s117, %s118
      %p130 = scmp.eq.s32.totalorder %s29, 1
      %p131 = por %p129, %p130
      %p133 = scmp.ne.s32.totalorder %s118, %s132
      %p134 = scmp.eq.s32.totalorder %s29, 0
      %p135 = por %p133, %p134
      %s137 = sadd.s32 %s136, 1
      %p140 = scmp.eq.s32.totalorder %s23, 1
      %p141 = scmp.ne.s32.totalorder %s136, %s138
      %p142 = scmp.eq.s32.totalorder %s23, 0
      %p143 = por %p141, %p142
      %p144 = scmp.ne.s32.totalorder %s136, %s138
      %p145 = scmp.eq.s32.totalorder %s28, 1
      %p146 = por %p144, %p145
      %p147 = scmp.ne.s32.totalorder %s138, %s139
      %p148 = scmp.eq.s32.totalorder %s28, 0
      %p149 = por %p147, %p148
      %p150 = scmp.ne.s32.totalorder %s138, %s139
      %p151 = scmp.eq.s32.totalorder %s29, 1
      %p152 = por %p150, %p151
      %p154 = scmp.ne.s32.totalorder %s139, %s153
      %p155 = scmp.eq.s32.totalorder %s29, 0
      %p156 = por %p154, %p155
      %s158 = sadd.s32 %s157, 1
      %p161 = scmp.eq.s32.totalorder %s23, 1
      %p162 = scmp.ne.s32.totalorder %s157, %s159
      %p163 = scmp.eq.s32.totalorder %s23, 0
      %p164 = por %p162, %p163
      %p165 = scmp.ne.s32.totalorder %s157, %s159
      %p166 = scmp.eq.s32.totalorder %s28, 1
      %p167 = por %p165, %p166
      %p168 = scmp.ne.s32.totalorder %s159, %s160
      %p169 = scmp.eq.s32.totalorder %s28, 0
      %p170 = por %p168, %p169
      %p171 = scmp.ne.s32.totalorder %s159, %s160
      %p172 = scmp.eq.s32.totalorder %s29, 1
      %p173 = por %p171, %p172
      %p175 = scmp.ne.s32.totalorder %s160, %s174
      %p176 = scmp.eq.s32.totalorder %s29, 0
      %p177 = por %p175, %p176
      %s179 = sadd.s32 %s178, 1
      %p182 = scmp.eq.s32.totalorder %s23, 1
      %p183 = scmp.ne.s32.totalorder %s178, %s180
      %p184 = scmp.eq.s32.totalorder %s23, 0
      %p185 = por %p183, %p184
      %p186 = scmp.ne.s32.totalorder %s178, %s180
      %p187 = scmp.eq.s32.totalorder %s28, 1
      %p188 = por %p186, %p187
      %p189 = scmp.ne.s32.totalorder %s180, %s181
      %p190 = scmp.eq.s32.totalorder %s28, 0
      %p191 = por %p189, %p190
      %p192 = scmp.ne.s32.totalorder %s180, %s181
      %p193 = scmp.eq.s32.totalorder %s29, 1
      %p194 = por %p192, %p193
      %p196 = scmp.ne.s32.totalorder %s181, %s195
      %p197 = scmp.eq.s32.totalorder %s29, 0
      %p198 = por %p196, %p197
      %s199 = ssub.s32 %s23, %s30
      %p200 = scmp.eq.s32.totalorder %s199, 0
      %s202 = sadd.s32 %s201, 1
      %s203 = scalar_select %p200, %s201, %s202
      %p206 = pneg %p200
      %p207 = scmp.eq.s32.totalorder %s23, 1
      %p208 = por %p206, %p207
      %p209 = scmp.ne.s32.totalorder %s201, %s204
      %p210 = scmp.eq.s32.totalorder %s23, 0
      %p211 = por %p209, %p210
      %p212 = scmp.ne.s32.totalorder %s201, %s204
      %p213 = scmp.eq.s32.totalorder %s28, 1
      %p214 = por %p212, %p213
      %p215 = scmp.ne.s32.totalorder %s204, %s205
      %p216 = scmp.eq.s32.totalorder %s28, 0
      %p217 = por %p215, %p216
      %p218 = scmp.ne.s32.totalorder %s204, %s205
      %p219 = scmp.eq.s32.totalorder %s29, 1
      %p220 = por %p218, %p219
      %p222 = scmp.ne.s32.totalorder %s205, %s221
      %p223 = scmp.eq.s32.totalorder %s29, 0
      %p224 = por %p222, %p223
      %s225 = ssub.s32 %s23, %s30
      %p226 = scmp.eq.s32.totalorder %s225, 0
      %s228 = sadd.s32 %s227, 1
      %s229 = scalar_select %p226, %s227, %s228
      %p232 = pneg %p226
      %p233 = scmp.eq.s32.totalorder %s23, 1
      %p234 = por %p232, %p233
      %p235 = scmp.ne.s32.totalorder %s227, %s230
      %p236 = scmp.eq.s32.totalorder %s23, 0
      %p237 = por %p235, %p236
      %p238 = scmp.ne.s32.totalorder %s227, %s230
      %p239 = scmp.eq.s32.totalorder %s28, 1
      %p240 = por %p238, %p239
      %p241 = scmp.ne.s32.totalorder %s230, %s231
      %p242 = scmp.eq.s32.totalorder %s28, 0
      %p243 = por %p241, %p242
      %p244 = scmp.ne.s32.totalorder %s230, %s231
      %p245 = scmp.eq.s32.totalorder %s29, 1
      %p246 = por %p244, %p245
      %p248 = scmp.ne.s32.totalorder %s231, %s247
      %p249 = scmp.eq.s32.totalorder %s29, 0
      %p250 = por %p248, %p249
      %p251 = scmp.le.s32.totalorder 1, %s23
      %p252 = scmp.lt.s32.totalorder %s23, 3
      %p253 = pnand %p251, %p252
      %p254 = pneg %p253
      // Predicated region
      $region9: #{tpu_custom_call.1} parent=5 // pred_check
        _
      $region10: #{tpu_custom_call.1} parent=5 // pred_check_branch
        %256 = sbr.rel (%p253) target = $region12
      $region11: #{tpu_custom_call.1} parent=5 // pred_region
        %s257 = ssub.s32 %s23, 1
        // Predicated region
        $region13: #{tpu_custom_call.1} parent=11 // pred_check
          %p258 = pneg %p44
        $region14: #{tpu_custom_call.1} parent=11 // pred_check_branch
          %260 = sbr.rel (%p258) target = $region16
        $region15: #{tpu_custom_call.1} parent=11 // pred_region
          _
        $region16: #{tpu_custom_call.1} parent=11 // pred_fallthru
          _
        // Predicated region
        $region17: #{tpu_custom_call.1} parent=11 // pred_check
          %p261 = pneg %p65
        $region18: #{tpu_custom_call.1} parent=11 // pred_check_branch
          %263 = sbr.rel (%p261) target = $region20
        $region19: #{tpu_custom_call.1} parent=11 // pred_region
          _
        $region20: #{tpu_custom_call.1} parent=11 // pred_fallthru
          _
        // Predicated region
        $region21: #{tpu_custom_call.1} parent=11 // pred_check
          %p264 = pneg %p86
        $region22: #{tpu_custom_call.1} parent=11 // pred_check_branch
          %266 = sbr.rel (%p264) target = $region24
        $region23: #{tpu_custom_call.1} parent=11 // pred_region
          _
        $region24: #{tpu_custom_call.1} parent=11 // pred_fallthru
          _
        // Predicated region
        $region25: #{tpu_custom_call.1} parent=11 // pred_check
          %p267 = pneg %p107
        $region26: #{tpu_custom_call.1} parent=11 // pred_check_branch
          %269 = sbr.rel (%p267) target = $region28
        $region27: #{tpu_custom_call.1} parent=11 // pred_region
          _
        $region28: #{tpu_custom_call.1} parent=11 // pred_fallthru
          _
        // Predicated region
        $region29: #{tpu_custom_call.1} parent=11 // pred_check
          %p270 = pneg %p128
        $region30: #{tpu_custom_call.1} parent=11 // pred_check_branch
          %272 = sbr.rel (%p270) target = $region32
        $region31: #{tpu_custom_call.1} parent=11 // pred_region
          _
        $region32: #{tpu_custom_call.1} parent=11 // pred_fallthru
          _
        // Predicated region
        $region33: #{tpu_custom_call.1} parent=11 // pred_check
          %p273 = pneg %p149
        $region34: #{tpu_custom_call.1} parent=11 // pred_check_branch
          %275 = sbr.rel (%p273) target = $region36
        $region35: #{tpu_custom_call.1} parent=11 // pred_region
          _
        $region36: #{tpu_custom_call.1} parent=11 // pred_fallthru
          _
        // Predicated region
        $region37: #{tpu_custom_call.1} parent=11 // pred_check
          %p276 = pneg %p170
        $region38: #{tpu_custom_call.1} parent=11 // pred_check_branch
          %278 = sbr.rel (%p276) target = $region40
        $region39: #{tpu_custom_call.1} parent=11 // pred_region
          _
        $region40: #{tpu_custom_call.1} parent=11 // pred_fallthru
          _
        // Predicated region
        $region41: #{tpu_custom_call.1} parent=11 // pred_check
          %p279 = pneg %p191
        $region42: #{tpu_custom_call.1} parent=11 // pred_check_branch
          %281 = sbr.rel (%p279) target = $region44
        $region43: #{tpu_custom_call.1} parent=11 // pred_region
          _
        $region44: #{tpu_custom_call.1} parent=11 // pred_fallthru
          _
      $region12: #{tpu_custom_call.1} parent=5 // pred_fallthru
        _
      %p282 = scmp.lt.s32.totalorder %s23, 2
      // Predicated region
      $region45: #{tpu_custom_call.1} parent=5 // pred_check
        %p283 = pneg %p282
      $region46: #{tpu_custom_call.1} parent=5 // pred_check_branch
        %285 = sbr.rel (%p283) target = $region48
      $region47: #{tpu_custom_call.1} parent=5 // pred_region
        // Predicated region
        $region49: #{tpu_custom_call.1} parent=47 // pred_check
          %p286 = pneg %p211
        $region50: #{tpu_custom_call.1} parent=47 // pred_check_branch
          %288 = sbr.rel (%p286) target = $region52
        $region51: #{tpu_custom_call.1} parent=47 // pred_region
          %p289 = scmp.lt.s32.totalorder %s23, 1
          %s290 = scalar_select %p289, %s23, 1
          %s291 = smul.addr %s290, 4
          %s292 = scalar_lea.vmem %s8, %s291
        $region52: #{tpu_custom_call.1} parent=47 // pred_fallthru
          _
      $region48: #{tpu_custom_call.1} parent=5 // pred_fallthru
        _
      %p293 = scmp.le.s32.totalorder 1, %s23
      %p294 = scmp.lt.s32.totalorder %s23, 3
      %p295 = pnand %p293, %p294
      %p296 = pneg %p295
      // Predicated region
      $region53: #{tpu_custom_call.1} parent=5 // pred_check
        _
      $region54: #{tpu_custom_call.1} parent=5 // pred_check_branch
        %298 = sbr.rel (%p295) target = $region56
      $region55: #{tpu_custom_call.1} parent=5 // pred_region
        %s299 = ssub.s32 %s23, 1
        %p300 = pneg %p44
        %p301 = pneg %p41
        %p302 = pneg %p65
        %p303 = pneg %p62
        %p304 = pneg %p86
        %p305 = pneg %p83
        %p306 = pneg %p107
        %p307 = pneg %p104
        %p308 = pneg %p128
        %p309 = pneg %p125
        %p310 = pneg %p149
        %p311 = pneg %p146
        %p312 = pneg %p170
        %p313 = pneg %p167
        %p314 = pneg %p191
        %p315 = pneg %p188
        %p316 = scmp.lt.s32.totalorder %s28, 1
        %s317 = scalar_select %p316, %s28, 1
        %s318 = smul.addr %s317, 4
        %s319 = scalar_lea.vmem %s8, %s318
        %p320 = pneg %p217
        %p321 = pneg %p214
        %p322 = pneg %p243
        %p323 = pneg %p240
        %s324 = sand.u32 %s230, 1
        %s325 = scalar_lea.sflag [#allocation6], %s324
        %s326 = sand.u32 %s230, 1
        %s327 = smul.addr %s326, 8
        %s328 = scalar_lea.vmem [#allocation5], %s327
        %p329 = scmp.lt.s32.totalorder %s28, 1
        %s330 = scalar_select %p329, %s28, 1
        %s331 = smul.addr %s330, 4
        %s332 = scalar_lea.vmem %s8, %s331
        %v334 = vld [vmem:[%s0] sm:$0xff]
        %s335 = sld [smem:[#allocation4]]
        %v336 = vstv %s335
        %v337 = vmul.f32 %v334, %v336
        %v338 = vld [vmem:[%s1] sm:$0x1]
        %340 = vset.pattern.permute.xlu0 0
        %341 = vperm.xlu0 %340, %v337
        %v342 = vpop.permute.xlu0 %341
        %v345 = vperm.slane %v338, 0
        %v347 = vsub.f32 %v342, %v345
        %v348 = vmul.f32 %v347, %v347
        %v349 = vadd.f32 %v348, 0.0
        %v350 = vmul.f32 %v349, 0.5
        %vm351 = vcmp.gt.f32.partialorder %v349, 0.0
        %v352 = vsel %vm351, %v349, 1.0
        %v353 = vlog2.pop %v352
        %v354 = vmul.f32 %v353, 0.6931472
        %v355 = vmul.f32 %v350, %v354
        %v356 = vld [vmem:[%s2] sm:$0xff]
        %v357 = vld [vmem:[%s2 + $0x8] sm:$0xff]
        %v358 = vld [vmem:[%s4] sm:$0x1]
        %v360 = vperm.slane %v358, 0
        %vm362 = vcmask 130048
        %v364 = vsel %vm362, %v355, 0
        %366 = vmatpush.msra.mxu0 0.0
        %367 = vmatpush.msra.mxu0 0.0
        %368 = vmatpush.msra.mxu0 0.0
        %369 = vmatpush.msra.mxu0 0.0
        %370 = vmatpush.msra.mxu0 0.0
        %371 = vmatpush.msra.mxu0 0.0
        %372 = vmatpush.msra.mxu0 0.0
        %373 = vmatpush.msra.mxu0 0.0
        %374 = vmatpush.msra.mxu0 0.0
        %375 = vmatpush.msra.mxu0 0.0
        %376 = vmatpush.msra.mxu0 0.0
        %377 = vmatpush.msra.mxu0 0.0
        %378 = vmatpush.msra.mxu0 0.0
        %379 = vmatpush.msra.mxu0 0.0
        %380 = vmatpush.msra.mxu0 %v357
        %381 = vmatpush.msra.mxu0 %v356
        %382 = vmatmul.f32.gmra.mxu0 %v364
        %v383 = vpop.f32.mrf.mxu0
        %v384 = vadd.f32 %v360, %v383
        %385 = vdwg.mxu0
        %v386 = vld [vmem:[#allocation2] sm:$0x1]
        %v388 = vperm.slane %v386, 0
        %v390 = vsub.f32 %v334, %v388
        %v391 = vld [vmem:[#allocation3] sm:$0x1]
        %v393 = vperm.slane %v391, 0
        %v395 = vmul.f32 %v390, %v393
        %v396 = vld [vmem:[%s3] sm:$0x1]
        %398 = vset.pattern.permute.xlu0 0
        %399 = vperm.xlu0 %398, %v395
        %v400 = vpop.permute.xlu0 %399
        %v403 = vperm.slane %v396, 0
        %v405 = vmul.f32 %v400, %v403
        %v406 = vadd.f32 %v384, %v405
        %v407 = vpack.c.bf16 %v406, %v406
        %v408 = vld [vmem:[%s332] sm:$0xf]
        %vm409 = vcmask 64512
        %v411 = vsel %vm409, %v407, 0
        %vm413 = vcmask 1043456
        %v415 = vsel %vm413, %v408, 0
        %417 = vmatpush.bf16.msra.mxu0 0
        %418 = vmatpush.bf16.msra.mxu0 0
        %419 = vmatpush.bf16.msra.mxu0 0
        %420 = vmatpush.bf16.msra.mxu0 0
        %421 = vmatpush.bf16.msra.mxu0 0
        %422 = vmatpush.bf16.msra.mxu0 0
        %423 = vmatpush.bf16.msra.mxu0 0
        %424 = vmatpush.bf16.msra.mxu0 %v415
        %425 = vmatmul.bf16.gmra.mxu0 %v411
        %v426 = vpop.f32.mrf.mxu0
        %v427 = vadd.f32 0.0, %v426
        %v428 = vpop.f32.mrf.mxu0
        %429 = vdwg.mxu0
        %430 = vst [vmem:[%s328] sm:$0xff] %v427
        %s431 = sand.u32 %s230, 1
        %s432 = scalar_lea.sflag [#allocation6], %s431
        %s433 = sand.u32 %s230, 1
        %s434 = smul.addr %s433, 8
        %s435 = scalar_lea.vmem [#allocation5], %s434
        // Predicated region
        $region57: #{tpu_custom_call.1} parent=55 // pred_check
          %p436 = pneg %p240
        $region58: #{tpu_custom_call.1} parent=55 // pred_check_branch
          %438 = sbr.rel (%p436) target = $region60
        $region59: #{tpu_custom_call.1} parent=55 // pred_region
          %440 = vsyncadd %s432, 0
          %s441 = smul.addr %s28, 8
          %s442 = scalar_lea.hbm %s9, %s441
          %s444 = sshll.u32 %s435, 4
          %s445 = int_to_ptr.vmem [resolvable:$true] %s444
          %s446 = sshll.u32 %s442, 4
          %s447 = int_to_ptr.hbm [resolvable:$true] %s446
          %449 = dma.vmem_to_hbm [thread:$0]  %s445, 128, %s447, %s432
        $region60: #{tpu_custom_call.1} parent=55 // pred_fallthru
          _
      $region56: #{tpu_custom_call.1} parent=5 // pred_fallthru
        _
      %p450 = scmp.le.s32.totalorder 2, %s23
      // Predicated region
      $region61: #{tpu_custom_call.1} parent=5 // pred_check
        %p451 = pneg %p450
      $region62: #{tpu_custom_call.1} parent=5 // pred_check_branch
        %453 = sbr.rel (%p451) target = $region64
      $region63: #{tpu_custom_call.1} parent=5 // pred_region
        %s454 = ssub.s32 %s23, 2
        // Predicated region
        $region65: #{tpu_custom_call.1} parent=63 // pred_check
          %p455 = pneg %p246
        $region66: #{tpu_custom_call.1} parent=63 // pred_check_branch
          %457 = sbr.rel (%p455) target = $region68
        $region67: #{tpu_custom_call.1} parent=63 // pred_region
          %s458 = sand.u32 %s231, 1
          %s459 = scalar_lea.sflag [#allocation6], %s458
          %s460 = sand.u32 %s231, 1
          %s461 = smul.addr %s460, 8
          %s462 = scalar_lea.vmem [#allocation5], %s461
          %464 = dma.done %s459, 128
        $region68: #{tpu_custom_call.1} parent=63 // pred_fallthru
          _
      $region64: #{tpu_custom_call.1} parent=5 // pred_fallthru
        _
    $region6: #{tpu_custom_call.1} parent=1 // loop_footer
      %s27 = sadd.s32 1, %s23
    $region7: #{tpu_custom_call.1} parent=1 // loop_footer_branch
      %22 = sbr.rel target = $region3
    $region8: #{tpu_custom_call.1} parent=1 // loop_exit
      _
    %465 = vsyncpa [#allocation6], 1
    %s466 = scalar_lea.sflag [#allocation6], 1
    %467 = vsyncpa %s466, 1

</llo_original>
